<compile_context>
chip_gen: v7x
topology: tpu7x:2x2x1
jax: 0.10.0
libtpu: 0.0.40
codegen_flags: <defaults>
</compile_context>

<pallas_src>
import functools

import jax
import jax.numpy as jnp
from jax.experimental import pallas as pl
from jax.experimental.pallas import tpu as pltpu


def _round_up(x, m):
    return ((x + m - 1) // m) * m


def _vmem_limit_bytes():
    """Generation-aware scoped-VMEM limit (v7x: 64 MiB/TC vs 128 MiB on v5e/v6e)."""
    try:
        cap = int(pltpu.get_tpu_info().vmem_capacity_bytes)
    except Exception:
        cap = 64 * 1024 * 1024
    return int(min(max(cap // 2, 32 * 1024 * 1024), 96 * 1024 * 1024))


# ----------------------------------------------------------------------------
# Prologue kernel: XW = X @ [W_l | W_r] + [0 | b]      (grid over row blocks)
# ----------------------------------------------------------------------------
def _dense_kernel(x_ref, w_ref, b_ref, o_ref):
    o_ref[...] = (jnp.dot(x_ref[...], w_ref[...],
                          preferred_element_type=jnp.float32)
                  + b_ref[...]).astype(o_ref.dtype)


def _dense(x, w, b, *, tm, vmem_limit):
    n, f = x.shape
    kout = w.shape[1]
    return pl.pallas_call(
        _dense_kernel,
        out_shape=jax.ShapeDtypeStruct((n, kout), jnp.float32),
        grid_spec=pltpu.PrefetchScalarGridSpec(
            num_scalar_prefetch=0,
            grid=(n // tm,),
            in_specs=[
                pl.BlockSpec((tm, f), lambda i: (i, 0)),
                pl.BlockSpec((f, kout), lambda i: (0, 0)),
                pl.BlockSpec((1, kout), lambda i: (0, 0)),
            ],
            out_specs=pl.BlockSpec((tm, kout), lambda i: (i, 0)),
        ),
        compiler_params=pltpu.CompilerParams(
            dimension_semantics=("parallel",),
            vmem_limit_bytes=vmem_limit,
        ),
    )(x, w, b)


# ----------------------------------------------------------------------------
# Main aggregation kernel:
#   acc(tm, H) += counts(tm, tk) @ XW_l(tk, H)      (k = reduction, last grid axis)
#   finalize:   out = act(acc * 1/deg + self_term)
# ----------------------------------------------------------------------------
def _sage_agg_kernel(a_ref, xwl_ref, self_ref, invdeg_ref, out_ref, acc_ref,
                     *, tk, activation, valid_out):
    k = pl.program_id(1)
    nk = pl.num_programs(1)

    @pl.when(k == 0)
    def _init():
        acc_ref[...] = jnp.zeros_like(acc_ref)

    # Counts arrive as int8 (halves the dominant HBM stream). Cast on the VPU via
    # f32->bf16 (exact for small integer multiplicities) so the MXU always runs the
    # bf16 x bf16 path -> portable across v5e/v6e/v7x.
    a_blk = a_ref[...].astype(jnp.float32).astype(jnp.bfloat16)
    # XW_l is VMEM-resident for the whole grid; slice the k-th row block for free.
    xwl_blk = xwl_ref[pl.ds(pl.multiple_of(k * tk, tk), tk), :]
    acc_ref[...] += jnp.dot(a_blk, xwl_blk, preferred_element_type=jnp.float32)

    @pl.when(k == nk - 1)
    def _finalize():
        # exact f32 mean scale + precomputed self term (x @ W_r + b)
        h = acc_ref[...] * invdeg_ref[...] + self_ref[...]
        if activation == "relu":
            out_ref[...] = jnp.maximum(h, 0.0).astype(out_ref.dtype)
        else:  # log_softmax over the first `valid_out` lanes; padded lanes -> -inf
            col = jax.lax.broadcasted_iota(jnp.int32, h.shape, 1)
            h = jnp.where(col < valid_out, h, -jnp.inf)
            m = jnp.max(h, axis=1, keepdims=True)
            s = h - m
            lse = jnp.log(jnp.sum(jnp.exp(s), axis=1, keepdims=True))
            out_ref[...] = (s - lse).astype(out_ref.dtype)


def _sage_layer(a_i8, invd, x_pro, w_cat, b_cat, *, npad_r, npad_c, out_dtype,
                activation, valid_out, tm, tk, vmem_limit):
    """One SAGE layer.

    a_i8:  [npad_r, npad_c] int8 neighbor counts
    invd:  [npad_r, 1]      f32 exact 1/deg
    x_pro: [npad_pro, Fpad] bf16 node features (npad_pro >= max(npad_r, npad_c))
    w_cat: [Fpad, 2*Hpad]   bf16 fused [W_l | W_r]
    b_cat: [1, 2*Hpad]      f32 fused [0 | b]
    """
    hpad = w_cat.shape[1] // 2

    # Prologue: per-node projections (tiny vs. the N^2 aggregation).
    xw = _dense(x_pro, w_cat, b_cat, tm=128, vmem_limit=vmem_limit)
    xwl = xw[:npad_c, :hpad].astype(jnp.bfloat16)   # aggregated operand
    self_t = xw[:npad_r, hpad:]                     # self term (incl. bias), f32

    grid = (npad_r // tm, npad_c // tk)
    kernel = functools.partial(_sage_agg_kernel, tk=tk,
                               activation=activation, valid_out=valid_out)

    return pl.pallas_call(
        kernel,
        out_shape=jax.ShapeDtypeStruct((npad_r, hpad), out_dtype),
        grid_spec=pltpu.PrefetchScalarGridSpec(
            num_scalar_prefetch=0,
            grid=grid,
            in_specs=[
                pl.BlockSpec((tm, tk), lambda i, k: (i, k)),        # A counts (int8)
                pl.BlockSpec((npad_c, hpad), lambda i, k: (0, 0)),  # XW_l, VMEM-resident
                pl.BlockSpec((tm, hpad), lambda i, k: (i, 0)),      # self term
                pl.BlockSpec((tm, 1), lambda i, k: (i, 0)),         # 1/deg
            ],
            out_specs=pl.BlockSpec((tm, hpad), lambda i, k: (i, 0)),
            scratch_shapes=[pltpu.VMEM((tm, hpad), jnp.float32)],
        ),
        compiler_params=pltpu.CompilerParams(
            dimension_semantics=("parallel", "arbitrary"),
            vmem_limit_bytes=vmem_limit,
        ),
    )(a_i8, xwl, self_t, invd)


# ----------------------------------------------------------------------------
# Full model wrapper: pad / cast / fuse weights, run two layers, slice.
# ----------------------------------------------------------------------------
def sage_model_forward(counts, inv_deg, x, params, *, tm=None, tk=None):
    n, f = x.shape
    h = params["w1l"].shape[1]
    c = params["w2l"].shape[1]

    # Tile selection (sweepable). Keep >=2 row blocks when the graph allows it so
    # the "parallel" row axis still shards across v7x's two TensorCores.
    if tm is None:
        tm = 256 if n >= 1024 else 128
        tm = max(32, min(tm, _round_up(n, 32)))
    if tk is None:
        tk = 1024 if n >= 2048 else (512 if n >= 512 else 256)
        tk = max(128, min(tk, _round_up(n, 128)))

    # Row / reduction dims of A padded independently (no max(tm,tk) waste).
    npad_r = _round_up(n, tm)
    npad_c = _round_up(n, tk)
    npad_pro = _round_up(max(npad_r, npad_c), 128)
    fpad = _round_up(f, 128)
    hpad = _round_up(h, 128)
    cpad = _round_up(c, 128)

    vmem_limit = _vmem_limit_bytes()

    # Graph operands: int8 counts (multiplicities > 127 would saturate; fine for
    # real graphs) + exact f32 1/deg applied in the kernel finalize.
    a_i8 = jnp.zeros((npad_r, npad_c), jnp.int8).at[:n, :n].set(
        jnp.clip(counts, 0.0, 127.0).astype(jnp.int8))
    invd = jnp.zeros((npad_r, 1), jnp.float32).at[:n, :].set(
        inv_deg.astype(jnp.float32).reshape(n, 1))

    # Fused per-layer weights [W_l | W_r]; bias only on the self (right) half.
    w1 = jnp.zeros((fpad, 2 * hpad), jnp.bfloat16)
    w1 = w1.at[:f, :h].set(params["w1l"].astype(jnp.bfloat16))
    w1 = w1.at[:f, hpad:hpad + h].set(params["w1r"].astype(jnp.bfloat16))
    b1 = jnp.zeros((1, 2 * hpad), jnp.float32).at[:, hpad:hpad + h].set(params["b1"])

    w2 = jnp.zeros((hpad, 2 * cpad), jnp.bfloat16)
    w2 = w2.at[:h, :c].set(params["w2l"].astype(jnp.bfloat16))
    w2 = w2.at[:h, cpad:cpad + c].set(params["w2r"].astype(jnp.bfloat16))
    b2 = jnp.zeros((1, 2 * cpad), jnp.float32).at[:, cpad:cpad + c].set(params["b2"])

    x_p = jnp.zeros((npad_pro, fpad), jnp.bfloat16).at[:n, :f].set(
        x.astype(jnp.bfloat16))

    # Layer 1: relu(SAGEConv1(x)); dropout(p=0.5) is identity in eval mode.
    h1 = _sage_layer(a_i8, invd, x_p, w1, b1,
                     npad_r=npad_r, npad_c=npad_c, out_dtype=jnp.bfloat16,
                     activation="relu", valid_out=hpad, tm=tm, tk=tk,
                     vmem_limit=vmem_limit)

    # Layer 2: log_softmax(SAGEConv2(h1)); re-pad rows up to the prologue size.
    h1_pro = jnp.zeros((npad_pro, hpad), jnp.bfloat16).at[:npad_r, :].set(h1)
    out_p = _sage_layer(a_i8, invd, h1_pro, w2, b2,
                        npad_r=npad_r, npad_c=npad_c, out_dtype=jnp.float32,
                        activation="log_softmax", valid_out=c, tm=tm, tk=tk,
                        vmem_limit=vmem_limit)

    return out_p[:n, :c]


# ----------------------------------------------------------------------------
# Graph / parameter helpers + pure-JAX reference for the correctness check.
# ----------------------------------------------------------------------------
def build_graph_operands(edge_index, num_nodes):
    """Dense neighbor-count matrix (duplicate edges keep multiplicity, matching
    PyG scatter-mean) and exact f32 inverse degree (deg-0 rows -> 0)."""
    src, dst = edge_index[0], edge_index[1]
    counts = jnp.zeros((num_nodes, num_nodes), jnp.float32).at[dst, src].add(1.0)
    deg = jnp.sum(counts, axis=1, keepdims=True)
    inv_deg = jnp.where(deg > 0, 1.0 / deg, 0.0)
    return counts, inv_deg


def init_params(key, in_features, hidden_units, num_classes):
    ks = jax.random.split(key, 6)

    def glorot(k, shape):
        fan_in, fan_out = shape
        lim = jnp.sqrt(6.0 / (fan_in + fan_out))
        return jax.random.uniform(k, shape, jnp.float32, -lim, lim)

    return {
        # stored already transposed: x @ W  (W: [in, out])
        "w1l": glorot(ks[0], (in_features, hidden_units)),
        "w1r": glorot(ks[1], (in_features, hidden_units)),
        "b1": 0.01 * jax.random.normal(ks[2], (1, hidden_units), jnp.float32),
        "w2l": glorot(ks[3], (hidden_units, num_classes)),
        "w2r": glorot(ks[4], (hidden_units, num_classes)),
        "b2": 0.01 * jax.random.normal(ks[5], (1, num_classes), jnp.float32),
    }


def sage_reference(counts, inv_deg, x, params):
    """Pure-JAX reference mirroring the kernel's bf16/f32 precision choices."""
    cnt = counts.astype(jnp.bfloat16)        # exact for small integer counts
    inv = inv_deg.astype(jnp.float32)

    def layer(x_bf16, wl, wr, b):
        wcat = jnp.concatenate([wl, wr], axis=1).astype(jnp.bfloat16)
        bcat = jnp.concatenate([jnp.zeros_like(b), b], axis=1)
        xw = jnp.dot(x_bf16, wcat, preferred_element_type=jnp.float32) + bcat
        hd = wl.shape[1]
        xwl = xw[:, :hd].astype(jnp.bfloat16)
        self_t = xw[:, hd:]
        agg = jnp.dot(cnt, xwl, preferred_element_type=jnp.float32)
        return agg * inv + self_t

    h1 = jnp.maximum(
        layer(x.astype(jnp.bfloat16), params["w1l"], params["w1r"], params["b1"]), 0.0)
    logits = layer(h1.astype(jnp.bfloat16), params["w2l"], params["w2r"], params["b2"])
    return jax.nn.log_softmax(logits, axis=1)


if __name__ == "__main__":
    key = jax.random.PRNGKey(0)
    k_feat, k_edge, k_param = jax.random.split(key, 3)

    # Small, Cora-like synthetic graph (exercises row/col/feature/class padding).
    num_nodes, in_features, hidden_units, num_classes = 200, 48, 32, 7
    num_edges = 800

    x = jax.random.normal(k_feat, (num_nodes, in_features), jnp.float32)
    edge_index = jax.random.randint(k_edge, (2, num_edges), 0, num_nodes)

    counts, inv_deg = build_graph_operands(edge_index, num_nodes)
    params = init_params(k_param, in_features, hidden_units, num_classes)

    out = sage_model_forward(counts, inv_deg, x, params)
    jax.block_until_ready(out)

    assert out.shape == (num_nodes, num_classes)

    # rows of log_softmax must exp-sum to ~1
    row_sums = jnp.sum(jnp.exp(out), axis=1)
    assert bool(jnp.all(jnp.abs(row_sums - 1.0) < 1e-3))

    # match the (bf16-mirrored) reference
    ref = sage_reference(counts, inv_deg, x, params)
    max_err = float(jnp.max(jnp.abs(out - ref)))
    assert max_err < 5e-2, f"max abs err vs reference: {max_err}"

    print("KERNEL_OK")
</pallas_src>

<mosaic_0001>
module attributes {stable_mosaic.version = 11 : i64} {
  func.func @_dense_kernel(%arg0: i32, %arg1: memref<128x128xbf16, #tpu.memory_space<vmem>>, %arg2: memref<128x256xbf16, #tpu.memory_space<vmem>>, %arg3: memref<1x256xf32, #tpu.memory_space<vmem>>, %arg4: memref<128x256xf32, #tpu.memory_space<vmem>>) attributes {dimension_semantics = [#tpu.dimension_semantics<parallel>], iteration_bounds = array<i64: 2>, scalar_prefetch = 0 : i64, scratch_operands = 0 : i64, tpu.core_type = #tpu.core_type<tc>, window_params = [{transform_indices = @transform_0, window_bounds = array<i64: 128, 128>}, {pipeline_mode = #tpu.pipeline_mode<synchronous>, transform_indices = @transform_1, window_bounds = array<i64: 128, 256>}, {pipeline_mode = #tpu.pipeline_mode<synchronous>, transform_indices = @transform_2, window_bounds = array<i64: 1, 256>}, {transform_indices = @transform_3, window_bounds = array<i64: 128, 256>}]} {
    %c0 = arith.constant 0 : index
    %c0_0 = arith.constant 0 : index
    %0 = vector.load %arg1[%c0, %c0_0] : memref<128x128xbf16, #tpu.memory_space<vmem>>, vector<128x128xbf16>
    %c0_1 = arith.constant 0 : index
    %c0_2 = arith.constant 0 : index
    %1 = vector.load %arg2[%c0_1, %c0_2] : memref<128x256xbf16, #tpu.memory_space<vmem>>, vector<128x256xbf16>
    %cst = arith.constant dense<0.000000e+00> : vector<128x256xf32>
    %2 = tpu.matmul %0, %1, %cst {dimension_numbers = #tpu.dot_dimension_numbers<[1], [0], [0], [1], [0, 0, 1, 1], [], []>} : vector<128x128xbf16>, vector<128x256xbf16>, vector<128x256xf32> -> vector<128x256xf32>
    %c0_3 = arith.constant 0 : index
    %c0_4 = arith.constant 0 : index
    %3 = vector.load %arg3[%c0_3, %c0_4] : memref<1x256xf32, #tpu.memory_space<vmem>>, vector<1x256xf32>
    %4 = vector.broadcast %3 : vector<1x256xf32> to vector<128x256xf32>
    %5 = arith.addf %2, %4 : vector<128x256xf32>
    %c0_5 = arith.constant 0 : index
    %c0_6 = arith.constant 0 : index
    %6 = vector.load %arg4[%c0_5, %c0_6] : memref<128x256xf32, #tpu.memory_space<vmem>>, vector<128x256xf32>
    tpu.vector_store %arg4[%c0_5, %c0_6], %5 {strides = array<i32>} : memref<128x256xf32, #tpu.memory_space<vmem>>, vector<128x256xf32>,
    return
  }
  func.func @transform_0(%arg0: i32) -> (i32, i32) {
    %c0_i32 = arith.constant 0 : i32
    %c0_i32_0 = arith.constant 0 : i32
    return %arg0, %c0_i32 : i32, i32
  }
  func.func @transform_1(%arg0: i32) -> (i32, i32) {
    %c0_i32 = arith.constant 0 : i32
    %c0_i32_0 = arith.constant 0 : i32
    %c0_i32_1 = arith.constant 0 : i32
    return %c0_i32, %c0_i32_0 : i32, i32
  }
  func.func @transform_2(%arg0: i32) -> (i32, i32) {
    %c0_i32 = arith.constant 0 : i32
    %c0_i32_0 = arith.constant 0 : i32
    %c0_i32_1 = arith.constant 0 : i32
    return %c0_i32, %c0_i32_0 : i32, i32
  }
  func.func @transform_3(%arg0: i32) -> (i32, i32) {
    %c0_i32 = arith.constant 0 : i32
    %c0_i32_0 = arith.constant 0 : i32
    return %arg0, %c0_i32 : i32, i32
  }
}

</mosaic_0001>

<llo_original>
// kernel: tpu_custom_call.1
$region0: #{tpu_custom_call.1}
  #allocation0 [shape = 'u32[]', space=smem, size = 0x4, offset = 0x4, fixed_abs, tag = 'smem constant byte address 0x4 - core index']
  #allocation1 [shape = 'u32[144,128]{1,0:T(1,128)}', space=vmem, size = 0x12000, scoped, tag = 'internal scratch']
  %s0 = inlined_call_operand.hbm [shape: bf16[256,128], index: 0, kind: input, shape index: {}]
  %s1 = inlined_call_operand.hbm [shape: bf16[128,256], index: 1, kind: input, shape index: {}]
  %s2 = inlined_call_operand.vmem [shape: f32[1,256], index: 2, kind: input, shape index: {}]
  %s3 = inlined_call_operand.hbm [shape: f32[256,256], index: 3, kind: output, shape index: {}]
  %s4 = sld [smem:[#allocation0]]
  $region53: #{tpu_custom_call.1} parent=0
    _
  %s6 = ssub.s32 1, %s4
  %s7 = scalar_select 0, %s6, %s4
  $region1: #{tpu_custom_call.1} parent=0
    #allocation2 [shape = 'u8[65536]{0}', space=vmem, size = 0x10000, scoped, tag = 'input window, operand 0']
    #allocation3 [shape = 's32[2]{0}', space=sflag, size = 0x8, scoped, tag = 'scoped memory for tpu_custom_call.1']
    #allocation4 [shape = 's32[2]{0}', space=sflag, size = 0x8, scoped, tag = 'scoped memory for tpu_custom_call.1']
    #allocation5 [shape = 'u8[65536]{0}', space=vmem, size = 0x10000, scoped, tag = 'input window, operand 1, single buffered']
    #allocation6 [shape = 's32[1]{0}', space=sflag, size = 0x4, scoped, tag = 'scoped memory for tpu_custom_call.1']
    #allocation7 [shape = 'u8[262144]{0}', space=vmem, size = 0x40000, scoped, tag = 'output window, operand 0']
    %8 = vsyncpa [#allocation3], 0
    %s9 = scalar_lea.sflag [#allocation3], 1
    %10 = vsyncpa %s9, 0
    %11 = vsyncpa [#allocation6], 0
    %12 = vsyncpa [#allocation4], 0
    %s13 = scalar_lea.sflag [#allocation4], 1
    %14 = vsyncpa %s13, 0
    loop: start=0, step=1, limit=4
    $region2: #{tpu_custom_call.1} parent=1 // loop_pre_header
      _
    $region3: #{tpu_custom_call.1} parent=1 // loop_header
      %s16 = sphi 0, %s20
      %p17 = scmp.ge.s32.totalorder %s16, 4
      %s26 = sphi 0, %s28
      %s29 = sphi 0, %s26
      %s30 = sphi 0, %s29
      %s46 = sphi 0, %s30
      %s50 = sphi 0, %s50
      %s52 = sphi 0, %s50
      %s53 = sphi 0, %s52
      %s67 = sphi 0, %s53
      %s71 = sphi 0, %s71
      %s73 = sphi 0, %s71
      %s74 = sphi 0, %s73
      %s88 = sphi 0, %s74
      %s94 = sphi 0, %s96
      %s97 = sphi 0, %s94
      %s98 = sphi 0, %s97
      %s114 = sphi 0, %s98
    $region4: #{tpu_custom_call.1} parent=1 // loop_header_branch
      %19 = sbr.rel (%p17) target = $region8
    $region5: #{tpu_custom_call.1} parent=1 // loop_body
      %s21 = ssub.s32 %s16, 1
      %s22 = ssub.s32 %s16, 2
      %s23 = sadd.s32 %s16, 1
      %s24 = ssub.s32 %s16, %s23
      %p25 = scmp.eq.s32.totalorder %s24, 0
      %s27 = sadd.s32 %s26, 1
      %s28 = scalar_select %p25, %s26, %s27
      %p31 = pneg %p25
      %p32 = scmp.eq.s32.totalorder %s16, 1
      %p33 = por %p31, %p32
      %p34 = scmp.ne.s32.totalorder %s26, %s29
      %p35 = scmp.eq.s32.totalorder %s16, 0
      %p36 = por %p34, %p35
      %p37 = scmp.ne.s32.totalorder %s26, %s29
      %p38 = scmp.eq.s32.totalorder %s21, 1
      %p39 = por %p37, %p38
      %p40 = scmp.ne.s32.totalorder %s29, %s30
      %p41 = scmp.eq.s32.totalorder %s21, 0
      %p42 = por %p40, %p41
      %p43 = scmp.ne.s32.totalorder %s29, %s30
      %p44 = scmp.eq.s32.totalorder %s22, 1
      %p45 = por %p43, %p44
      %p47 = scmp.ne.s32.totalorder %s30, %s46
      %p48 = scmp.eq.s32.totalorder %s22, 0
      %p49 = por %p47, %p48
      %s51 = sadd.s32 %s50, 1
      %p54 = scmp.eq.s32.totalorder %s16, 1
      %p55 = scmp.ne.s32.totalorder %s50, %s52
      %p56 = scmp.eq.s32.totalorder %s16, 0
      %p57 = por %p55, %p56
      %p58 = scmp.ne.s32.totalorder %s50, %s52
      %p59 = scmp.eq.s32.totalorder %s21, 1
      %p60 = por %p58, %p59
      %p61 = scmp.ne.s32.totalorder %s52, %s53
      %p62 = scmp.eq.s32.totalorder %s21, 0
      %p63 = por %p61, %p62
      %p64 = scmp.ne.s32.totalorder %s52, %s53
      %p65 = scmp.eq.s32.totalorder %s22, 1
      %p66 = por %p64, %p65
      %p68 = scmp.ne.s32.totalorder %s53, %s67
      %p69 = scmp.eq.s32.totalorder %s22, 0
      %p70 = por %p68, %p69
      %s72 = sadd.s32 %s71, 1
      %p75 = scmp.eq.s32.totalorder %s16, 1
      %p76 = scmp.ne.s32.totalorder %s71, %s73
      %p77 = scmp.eq.s32.totalorder %s16, 0
      %p78 = por %p76, %p77
      %p79 = scmp.ne.s32.totalorder %s71, %s73
      %p80 = scmp.eq.s32.totalorder %s21, 1
      %p81 = por %p79, %p80
      %p82 = scmp.ne.s32.totalorder %s73, %s74
      %p83 = scmp.eq.s32.totalorder %s21, 0
      %p84 = por %p82, %p83
      %p85 = scmp.ne.s32.totalorder %s73, %s74
      %p86 = scmp.eq.s32.totalorder %s22, 1
      %p87 = por %p85, %p86
      %p89 = scmp.ne.s32.totalorder %s74, %s88
      %p90 = scmp.eq.s32.totalorder %s22, 0
      %p91 = por %p89, %p90
      %s92 = ssub.s32 %s16, %s23
      %p93 = scmp.eq.s32.totalorder %s92, 0
      %s95 = sadd.s32 %s94, 1
      %s96 = scalar_select %p93, %s94, %s95
      %p99 = pneg %p93
      %p100 = scmp.eq.s32.totalorder %s16, 1
      %p101 = por %p99, %p100
      %p102 = scmp.ne.s32.totalorder %s94, %s97
      %p103 = scmp.eq.s32.totalorder %s16, 0
      %p104 = por %p102, %p103
      %p105 = scmp.ne.s32.totalorder %s94, %s97
      %p106 = scmp.eq.s32.totalorder %s21, 1
      %p107 = por %p105, %p106
      %p108 = scmp.ne.s32.totalorder %s97, %s98
      %p109 = scmp.eq.s32.totalorder %s21, 0
      %p110 = por %p108, %p109
      %p111 = scmp.ne.s32.totalorder %s97, %s98
      %p112 = scmp.eq.s32.totalorder %s22, 1
      %p113 = por %p111, %p112
      %p115 = scmp.ne.s32.totalorder %s98, %s114
      %p116 = scmp.eq.s32.totalorder %s22, 0
      %p117 = por %p115, %p116
      %p118 = scmp.le.s32.totalorder 1, %s16
      %p119 = scmp.lt.s32.totalorder %s16, 3
      %p120 = pnand %p118, %p119
      %p121 = pneg %p120
      // Predicated region
      $region9: #{tpu_custom_call.1} parent=5 // pred_check
        _
      $region10: #{tpu_custom_call.1} parent=5 // pred_check_branch
        %123 = sbr.rel (%p120) target = $region12
      $region11: #{tpu_custom_call.1} parent=5 // pred_region
        %s124 = ssub.s32 %s16, 1
        // Predicated region
        $region13: #{tpu_custom_call.1} parent=11 // pred_check
          %p125 = pneg %p63
        $region14: #{tpu_custom_call.1} parent=11 // pred_check_branch
          %127 = sbr.rel (%p125) target = $region16
        $region15: #{tpu_custom_call.1} parent=11 // pred_region
          %s129 = ssub.s32 2048, 2048
          %130 = vsyncadd [#allocation6], %s129
          %s131 = sshll.u32 [#allocation5], 4
          %s132 = int_to_ptr.vmem [resolvable:$true] %s131
          %137 = dma.hbm_to_vmem [thread:$0]  %s1, 2048, %s132, [#allocation6], 128, 128, 8
        $region16: #{tpu_custom_call.1} parent=11 // pred_fallthru
          _
        // Predicated region
        $region17: #{tpu_custom_call.1} parent=11 // pred_check
          %p138 = pneg %p84
        $region18: #{tpu_custom_call.1} parent=11 // pred_check_branch
          %140 = sbr.rel (%p138) target = $region20
        $region19: #{tpu_custom_call.1} parent=11 // pred_region
          _
        $region20: #{tpu_custom_call.1} parent=11 // pred_fallthru
          _
      $region12: #{tpu_custom_call.1} parent=5 // pred_fallthru
        _
      %p141 = scmp.lt.s32.totalorder %s16, 2
      // Predicated region
      $region21: #{tpu_custom_call.1} parent=5 // pred_check
        %p142 = pneg %p141
      $region22: #{tpu_custom_call.1} parent=5 // pred_check_branch
        %144 = sbr.rel (%p142) target = $region24
      $region23: #{tpu_custom_call.1} parent=5 // pred_region
        // Predicated region
        $region25: #{tpu_custom_call.1} parent=23 // pred_check
          %p145 = pneg %p36
        $region26: #{tpu_custom_call.1} parent=23 // pred_check_branch
          %147 = sbr.rel (%p145) target = $region28
        $region27: #{tpu_custom_call.1} parent=23 // pred_region
          %s148 = sand.u32 %s26, 1
          %s149 = scalar_lea.sflag [#allocation3], %s148
          %s150 = sand.u32 %s26, 1
          %s151 = smul.addr %s150, 64
          %s152 = scalar_lea.vmem [#allocation2], %s151
          %s153 = smul.u32 16, %s16
          %s155 = ssub.s32 1024, 1024
          %156 = vsyncadd %s149, %s155
          %s157 = smul.addr %s153, 64
          %s158 = scalar_lea.hbm %s0, %s157
          %s159 = sshll.u32 %s152, 4
          %s160 = int_to_ptr.vmem [resolvable:$true] %s159
          %165 = dma.hbm_to_vmem [thread:$0]  %s158, 1024, %s160, %s149, 64, 64, 4
        $region28: #{tpu_custom_call.1} parent=23 // pred_fallthru
          _
      $region24: #{tpu_custom_call.1} parent=5 // pred_fallthru
        _
      %p166 = scmp.le.s32.totalorder 1, %s16
      %p167 = scmp.lt.s32.totalorder %s16, 3
      %p168 = pnand %p166, %p167
      %p169 = pneg %p168
      // Predicated region
      $region29: #{tpu_custom_call.1} parent=5 // pred_check
        _
      $region30: #{tpu_custom_call.1} parent=5 // pred_check_branch
        %171 = sbr.rel (%p168) target = $region32
      $region31: #{tpu_custom_call.1} parent=5 // pred_region
        %s172 = ssub.s32 %s16, 1
        %s173 = sand.u32 %s29, 1
        %s174 = scalar_lea.sflag [#allocation3], %s173
        %s175 = sand.u32 %s29, 1
        %s176 = smul.addr %s175, 64
        %s177 = scalar_lea.vmem [#allocation2], %s176
        // Predicated region
        $region33: #{tpu_custom_call.1} parent=31 // pred_check
          %p178 = pneg %p42
        $region34: #{tpu_custom_call.1} parent=31 // pred_check_branch
          %180 = sbr.rel (%p178) target = $region36
        $region35: #{tpu_custom_call.1} parent=31 // pred_region
          %181 = dma.done %s174, 1024
        $region36: #{tpu_custom_call.1} parent=31 // pred_fallthru
          _
        // Predicated region
        $region37: #{tpu_custom_call.1} parent=31 // pred_check
          %p182 = pneg %p63
        $region38: #{tpu_custom_call.1} parent=31 // pred_check_branch
          %184 = sbr.rel (%p182) target = $region40
        $region39: #{tpu_custom_call.1} parent=31 // pred_region
          %185 = dma.done [#allocation6], 2048
        $region40: #{tpu_custom_call.1} parent=31 // pred_fallthru
          _
        %s186 = sand.u32 %s29, 1
        %s187 = scalar_lea.sflag [#allocation3], %s186
        %s188 = sand.u32 %s29, 1
        %s189 = smul.addr %s188, 64
        %s190 = scalar_lea.vmem [#allocation2], %s189
        %p191 = pneg %p42
        %p192 = pneg %p39
        %p193 = pneg %p63
        %p194 = pneg %p60
        %p195 = pneg %p84
        %p196 = pneg %p81
        %p197 = pneg %p110
        %p198 = pneg %p107
        %s199 = sand.u32 %s97, 1
        %s200 = scalar_lea.sflag [#allocation4], %s199
        %s201 = sand.u32 %s97, 1
        %s202 = smul.addr %s201, 256
        %s203 = scalar_lea.vmem [#allocation7], %s202
        %s204 = smul.u32 16, %s21
        %s205 = smul.u32 16, %s21
        %v207 = vld [vmem:[%s177] sm:$0xf]
        %v208 = vld [vmem:[%s177 + $0x4] sm:$0xf]
        %v209 = vld [vmem:[%s177 + $0x8] sm:$0xf]
        %v210 = vld [vmem:[%s177 + $0xc] sm:$0xf]
        %v211 = vld [vmem:[%s177 + $0x10] sm:$0xf]
        %v212 = vld [vmem:[%s177 + $0x14] sm:$0xf]
        %v213 = vld [vmem:[%s177 + $0x18] sm:$0xf]
        %v214 = vld [vmem:[%s177 + $0x1c] sm:$0xf]
        %v215 = vld [vmem:[%s177 + $0x20] sm:$0xf]
        %v216 = vld [vmem:[%s177 + $0x24] sm:$0xf]
        %v217 = vld [vmem:[%s177 + $0x28] sm:$0xf]
        %v218 = vld [vmem:[%s177 + $0x2c] sm:$0xf]
        %v219 = vld [vmem:[%s177 + $0x30] sm:$0xf]
        %v220 = vld [vmem:[%s177 + $0x34] sm:$0xf]
        %v221 = vld [vmem:[%s177 + $0x38] sm:$0xf]
        %v222 = vld [vmem:[%s177 + $0x3c] sm:$0xf]
        %v223 = vld [vmem:[#allocation5] sm:$0xff]
        %v224 = vld [vmem:[#allocation5 + $0x8] sm:$0xff]
        %v225 = vld [vmem:[#allocation5 + $0x10] sm:$0xff]
        %v226 = vld [vmem:[#allocation5 + $0x18] sm:$0xff]
        %v227 = vld [vmem:[#allocation5 + $0x20] sm:$0xff]
        %v228 = vld [vmem:[#allocation5 + $0x28] sm:$0xff]
        %v229 = vld [vmem:[#allocation5 + $0x30] sm:$0xff]
        %v230 = vld [vmem:[#allocation5 + $0x38] sm:$0xff]
        %v231 = vld [vmem:[#allocation5 + $0x40] sm:$0xff]
        %v232 = vld [vmem:[#allocation5 + $0x48] sm:$0xff]
        %v233 = vld [vmem:[#allocation5 + $0x50] sm:$0xff]
        %v234 = vld [vmem:[#allocation5 + $0x58] sm:$0xff]
        %v235 = vld [vmem:[#allocation5 + $0x60] sm:$0xff]
        %v236 = vld [vmem:[#allocation5 + $0x68] sm:$0xff]
        %v237 = vld [vmem:[#allocation5 + $0x70] sm:$0xff]
        %v238 = vld [vmem:[#allocation5 + $0x78] sm:$0xff]
        %v239 = vld [vmem:[%s2] sm:$0x3]
        %v241 = vlaneseq
        %v242 = vshrl.u32 %v241, 7
        %v243 = vsub.s32 0, %v242
        %v244 = vrot.slane %v239, %v243
        %v245 = vlaneseq
        %v246 = vshrl.u32 %v245, 7
        %v247 = vsub.s32 1, %v246
        %v248 = vrot.slane %v239, %v247
        %v267 = vunpack.c.l.b16 %v207
        %v268 = vunpack.c.l.b16 %v208
        %v269 = vunpack.c.l.b16 %v209
        %v270 = vunpack.c.l.b16 %v210
        %v271 = vunpack.c.l.b16 %v211
        %v272 = vunpack.c.l.b16 %v212
        %v273 = vunpack.c.l.b16 %v213
        %v274 = vunpack.c.l.b16 %v214
        %v275 = vunpack.c.l.b16 %v215
        %v276 = vunpack.c.l.b16 %v216
        %v277 = vunpack.c.l.b16 %v217
        %v278 = vunpack.c.l.b16 %v218
        %v279 = vunpack.c.l.b16 %v219
        %v280 = vunpack.c.l.b16 %v220
        %v281 = vunpack.c.l.b16 %v221
        %v282 = vunpack.c.l.b16 %v222
        %v283 = vpack.c.b16 %v268, %v267
        %v284 = vpack.c.b16 %v270, %v269
        %v285 = vpack.c.b16 %v272, %v271
        %v286 = vpack.c.b16 %v274, %v273
        %v287 = vpack.c.b16 %v276, %v275
        %v288 = vpack.c.b16 %v278, %v277
        %v289 = vpack.c.b16 %v280, %v279
        %v290 = vpack.c.b16 %v282, %v281
        %v315 = vunpack.c.l.b16 %v223
        %v316 = vunpack.c.h.b16 %v223
        %v317 = vunpack.c.l.b16 %v224
        %v318 = vunpack.c.h.b16 %v224
        %v319 = vunpack.c.l.b16 %v225
        %v320 = vunpack.c.h.b16 %v225
        %v321 = vunpack.c.l.b16 %v226
        %v322 = vunpack.c.h.b16 %v226
        %v323 = vunpack.c.l.b16 %v227
        %v324 = vunpack.c.h.b16 %v227
        %v325 = vunpack.c.l.b16 %v228
        %v326 = vunpack.c.h.b16 %v228
        %v327 = vunpack.c.l.b16 %v229
        %v328 = vunpack.c.h.b16 %v229
        %v329 = vunpack.c.l.b16 %v230
        %v330 = vunpack.c.h.b16 %v230
        %v331 = vunpack.c.l.b16 %v231
        %v332 = vunpack.c.h.b16 %v231
        %v333 = vunpack.c.l.b16 %v232
        %v334 = vunpack.c.h.b16 %v232
        %v335 = vunpack.c.l.b16 %v233
        %v336 = vunpack.c.h.b16 %v233
        %v337 = vunpack.c.l.b16 %v234
        %v338 = vunpack.c.h.b16 %v234
        %v339 = vunpack.c.l.b16 %v235
        %v340 = vunpack.c.h.b16 %v235
        %v341 = vunpack.c.l.b16 %v236
        %v342 = vunpack.c.h.b16 %v236
        %v343 = vunpack.c.l.b16 %v237
        %v344 = vunpack.c.h.b16 %v237
        %v345 = vunpack.c.l.b16 %v238
        %v346 = vunpack.c.h.b16 %v238
        %v347 = vpack.c.b16 %v317, %v315
        %v348 = vpack.c.b16 %v318, %v316
        %v349 = vpack.c.b16 %v321, %v319
        %v350 = vpack.c.b16 %v322, %v320
        %v351 = vpack.c.b16 %v325, %v323
        %v352 = vpack.c.b16 %v326, %v324
        %v353 = vpack.c.b16 %v329, %v327
        %v354 = vpack.c.b16 %v330, %v328
        %v355 = vpack.c.b16 %v333, %v331
        %v356 = vpack.c.b16 %v334, %v332
        %v357 = vpack.c.b16 %v337, %v335
        %v358 = vpack.c.b16 %v338, %v336
        %v359 = vpack.c.b16 %v341, %v339
        %v360 = vpack.c.b16 %v342, %v340
        %v361 = vpack.c.b16 %v345, %v343
        %v362 = vpack.c.b16 %v346, %v344
        %379 = vmatprep.subr.bf16.mxu0 %v348
        %380 = vmatpush1.bf16.msra.mxu0 %v347
        %381 = vmatprep.subr.bf16.mxu0 %v350
        %382 = vmatpush1.bf16.msra.mxu0 %v349
        %383 = vmatprep.subr.bf16.mxu0 %v352
        %384 = vmatpush1.bf16.msra.mxu0 %v351
        %385 = vmatprep.subr.bf16.mxu0 %v354
        %386 = vmatpush1.bf16.msra.mxu0 %v353
        %387 = vmatprep.subr.bf16.mxu0 %v356
        %388 = vmatpush1.bf16.msra.mxu0 %v355
        %389 = vmatprep.subr.bf16.mxu0 %v358
        %390 = vmatpush1.bf16.msra.mxu0 %v357
        %391 = vmatprep.subr.bf16.mxu0 %v360
        %392 = vmatpush1.bf16.msra.mxu0 %v359
        %393 = vmatprep.subr.bf16.mxu0 %v362
        %394 = vmatpush1.bf16.msra.mxu0 %v361
        %395 = vmatprep.subr.bf16.mxu0 0
        %396 = vmatpush1.bf16.msra.mxu0 0
        %397 = vmatprep.subr.bf16.mxu0 0
        %398 = vmatpush1.bf16.msra.mxu0 0
        %399 = vmatprep.subr.bf16.mxu0 0
        %400 = vmatpush1.bf16.msra.mxu0 0
        %401 = vmatprep.subr.bf16.mxu0 0
        %402 = vmatpush1.bf16.msra.mxu0 0
        %403 = vmatprep.subr.bf16.mxu0 0
        %404 = vmatpush1.bf16.msra.mxu0 0
        %405 = vmatprep.subr.bf16.mxu0 0
        %406 = vmatpush1.bf16.msra.mxu0 0
        %407 = vmatprep.subr.bf16.mxu0 0
        %408 = vmatpush1.bf16.msra.mxu0 0
        %409 = vmatprep.subr.bf16.mxu0 0
        %410 = vmatpush1.bf16.msra.mxu0 0
        %411 = vmatprep.mubr.bf16.mxu0 0
        %412 = vmatmul.mubr.bf16.gmra.mrb[0].mxu0 %v283
        %v413 = vpop.f32.mrb[0].mxu0
        %v414 = vadd.f32 %v244, %v413
        %v415 = vpop.f32.mrb[0].mxu0
        %v416 = vadd.f32 %v248, %v415
        %v417 = vpop.f32.mrb[0].mxu0
        %v418 = vadd.f32 %v244, %v417
        %v419 = vpop.f32.mrb[0].mxu0
        %v420 = vadd.f32 %v248, %v419
        %421 = vmatprep.mubr.bf16.mxu0 0
        %422 = vmatmul.mubr.bf16.gmra.mrb[0].mxu0 %v284
        %v423 = vpop.f32.mrb[0].mxu0
        %v424 = vadd.f32 %v244, %v423
        %v425 = vpop.f32.mrb[0].mxu0
        %v426 = vadd.f32 %v248, %v425
        %v427 = vpop.f32.mrb[0].mxu0
        %v428 = vadd.f32 %v244, %v427
        %v429 = vpop.f32.mrb[0].mxu0
        %v430 = vadd.f32 %v248, %v429
        %431 = vmatprep.mubr.bf16.mxu0 0
        %432 = vmatmul.mubr.bf16.gmra.mrb[0].mxu0 %v285
        %v433 = vpop.f32.mrb[0].mxu0
        %v434 = vadd.f32 %v244, %v433
        %v435 = vpop.f32.mrb[0].mxu0
        %v436 = vadd.f32 %v248, %v435
        %v437 = vpop.f32.mrb[0].mxu0
        %v438 = vadd.f32 %v244, %v437
        %v439 = vpop.f32.mrb[0].mxu0
        %v440 = vadd.f32 %v248, %v439
        %441 = vmatprep.mubr.bf16.mxu0 0
        %442 = vmatmul.mubr.bf16.gmra.mrb[0].mxu0 %v286
        %v443 = vpop.f32.mrb[0].mxu0
        %v444 = vadd.f32 %v244, %v443
        %v445 = vpop.f32.mrb[0].mxu0
        %v446 = vadd.f32 %v248, %v445
        %v447 = vpop.f32.mrb[0].mxu0
        %v448 = vadd.f32 %v244, %v447
        %v449 = vpop.f32.mrb[0].mxu0
        %v450 = vadd.f32 %v248, %v449
        %451 = vmatprep.mubr.bf16.mxu0 0
        %452 = vmatmul.mubr.bf16.gmra.mrb[0].mxu0 %v287
        %v453 = vpop.f32.mrb[0].mxu0
        %v454 = vadd.f32 %v244, %v453
        %v455 = vpop.f32.mrb[0].mxu0
        %v456 = vadd.f32 %v248, %v455
        %v457 = vpop.f32.mrb[0].mxu0
        %v458 = vadd.f32 %v244, %v457
        %v459 = vpop.f32.mrb[0].mxu0
        %v460 = vadd.f32 %v248, %v459
        %461 = vmatprep.mubr.bf16.mxu0 0
        %462 = vmatmul.mubr.bf16.gmra.mrb[0].mxu0 %v288
        %v463 = vpop.f32.mrb[0].mxu0
        %v464 = vadd.f32 %v244, %v463
        %v465 = vpop.f32.mrb[0].mxu0
        %v466 = vadd.f32 %v248, %v465
        %v467 = vpop.f32.mrb[0].mxu0
        %v468 = vadd.f32 %v244, %v467
        %v469 = vpop.f32.mrb[0].mxu0
        %v470 = vadd.f32 %v248, %v469
        %471 = vmatprep.mubr.bf16.mxu0 0
        %472 = vmatmul.mubr.bf16.gmra.mrb[0].mxu0 %v289
        %v473 = vpop.f32.mrb[0].mxu0
        %v474 = vadd.f32 %v244, %v473
        %v475 = vpop.f32.mrb[0].mxu0
        %v476 = vadd.f32 %v248, %v475
        %v477 = vpop.f32.mrb[0].mxu0
        %v478 = vadd.f32 %v244, %v477
        %v479 = vpop.f32.mrb[0].mxu0
        %v480 = vadd.f32 %v248, %v479
        %481 = vmatprep.mubr.bf16.mxu0 0
        %482 = vmatmul.mubr.bf16.gmra.mrb[0].mxu0 %v290
        %v483 = vpop.f32.mrb[0].mxu0
        %v484 = vadd.f32 %v244, %v483
        %v485 = vpop.f32.mrb[0].mxu0
        %v486 = vadd.f32 %v248, %v485
        %v487 = vpop.f32.mrb[0].mxu0
        %v488 = vadd.f32 %v244, %v487
        %v489 = vpop.f32.mrb[0].mxu0
        %v490 = vadd.f32 %v248, %v489
        %491 = vdwg.mxu0
        %492 = vst [vmem:[%s203] sm:$0xff] %v414
        %493 = vst [vmem:[%s203 + $0x8] sm:$0xff] %v416
        %494 = vst [vmem:[%s203 + $0x10] sm:$0xff] %v418
        %495 = vst [vmem:[%s203 + $0x18] sm:$0xff] %v420
        %496 = vst [vmem:[%s203 + $0x20] sm:$0xff] %v424
        %497 = vst [vmem:[%s203 + $0x28] sm:$0xff] %v426
        %498 = vst [vmem:[%s203 + $0x30] sm:$0xff] %v428
        %499 = vst [vmem:[%s203 + $0x38] sm:$0xff] %v430
        %500 = vst [vmem:[%s203 + $0x40] sm:$0xff] %v434
        %501 = vst [vmem:[%s203 + $0x48] sm:$0xff] %v436
        %502 = vst [vmem:[%s203 + $0x50] sm:$0xff] %v438
        %503 = vst [vmem:[%s203 + $0x58] sm:$0xff] %v440
        %504 = vst [vmem:[%s203 + $0x60] sm:$0xff] %v444
        %505 = vst [vmem:[%s203 + $0x68] sm:$0xff] %v446
        %506 = vst [vmem:[%s203 + $0x70] sm:$0xff] %v448
        %507 = vst [vmem:[%s203 + $0x78] sm:$0xff] %v450
        %508 = vst [vmem:[%s203 + $0x80] sm:$0xff] %v454
        %509 = vst [vmem:[%s203 + $0x88] sm:$0xff] %v456
        %510 = vst [vmem:[%s203 + $0x90] sm:$0xff] %v458
        %511 = vst [vmem:[%s203 + $0x98] sm:$0xff] %v460
        %512 = vst [vmem:[%s203 + $0xa0] sm:$0xff] %v464
        %513 = vst [vmem:[%s203 + $0xa8] sm:$0xff] %v466
        %514 = vst [vmem:[%s203 + $0xb0] sm:$0xff] %v468
        %515 = vst [vmem:[%s203 + $0xb8] sm:$0xff] %v470
        %516 = vst [vmem:[%s203 + $0xc0] sm:$0xff] %v474
        %517 = vst [vmem:[%s203 + $0xc8] sm:$0xff] %v476
        %518 = vst [vmem:[%s203 + $0xd0] sm:$0xff] %v478
        %519 = vst [vmem:[%s203 + $0xd8] sm:$0xff] %v480
        %520 = vst [vmem:[%s203 + $0xe0] sm:$0xff] %v484
        %521 = vst [vmem:[%s203 + $0xe8] sm:$0xff] %v486
        %522 = vst [vmem:[%s203 + $0xf0] sm:$0xff] %v488
        %523 = vst [vmem:[%s203 + $0xf8] sm:$0xff] %v490
        %s524 = sand.u32 %s97, 1
        %s525 = scalar_lea.sflag [#allocation4], %s524
        %s526 = sand.u32 %s97, 1
        %s527 = smul.addr %s526, 256
        %s528 = scalar_lea.vmem [#allocation7], %s527
        // Predicated region
        $region41: #{tpu_custom_call.1} parent=31 // pred_check
          %p529 = pneg %p107
        $region42: #{tpu_custom_call.1} parent=31 // pred_check_branch
          %531 = sbr.rel (%p529) target = $region44
        $region43: #{tpu_custom_call.1} parent=31 // pred_region
          %s532 = smul.u32 16, %s21
          %s534 = ssub.s32 4096, 4096
          %535 = vsyncadd %s525, %s534
          %s536 = smul.addr %s532, 2
          %s537 = smul.addr %s536, 128
          %s538 = scalar_lea.hbm %s3, %s537
          %s539 = sshll.u32 %s528, 4
          %s540 = int_to_ptr.vmem [resolvable:$true] %s539
          %545 = dma.vmem_to_hbm [thread:$0]  %s540, 4096, %s538, %s525, 256, 256, 16
        $region44: #{tpu_custom_call.1} parent=31 // pred_fallthru
          _
      $region32: #{tpu_custom_call.1} parent=5 // pred_fallthru
        _
      %p546 = scmp.le.s32.totalorder 2, %s16
      // Predicated region
      $region45: #{tpu_custom_call.1} parent=5 // pred_check
        %p547 = pneg %p546
      $region46: #{tpu_custom_call.1} parent=5 // pred_check_branch
        %549 = sbr.rel (%p547) target = $region48
      $region47: #{tpu_custom_call.1} parent=5 // pred_region
        %s550 = ssub.s32 %s16, 2
        // Predicated region
        $region49: #{tpu_custom_call.1} parent=47 // pred_check
          %p551 = pneg %p113
        $region50: #{tpu_custom_call.1} parent=47 // pred_check_branch
          %553 = sbr.rel (%p551) target = $region52
        $region51: #{tpu_custom_call.1} parent=47 // pred_region
          %s554 = sand.u32 %s98, 1
          %s555 = scalar_lea.sflag [#allocation4], %s554
          %s556 = sand.u32 %s98, 1
          %s557 = smul.addr %s556, 256
          %s558 = scalar_lea.vmem [#allocation7], %s557
          %559 = dma.done %s555, 4096
        $region52: #{tpu_custom_call.1} parent=47 // pred_fallthru
          _
      $region48: #{tpu_custom_call.1} parent=5 // pred_fallthru
        _
    $region6: #{tpu_custom_call.1} parent=1 // loop_footer
      %s20 = sadd.s32 1, %s16
    $region7: #{tpu_custom_call.1} parent=1 // loop_footer_branch
      %15 = sbr.rel target = $region3
    $region8: #{tpu_custom_call.1} parent=1 // loop_exit
      _
    %560 = vsyncpa [#allocation3], 1
    %s561 = scalar_lea.sflag [#allocation3], 1
    %562 = vsyncpa %s561, 1
    %563 = vsyncpa [#allocation6], 1
    %564 = vsyncpa [#allocation4], 1
    %s565 = scalar_lea.sflag [#allocation4], 1
    %566 = vsyncpa %s565, 1

</llo_original>
